<compile_context>
chip_gen: v7x
topology: tpu7x:2x2x1
jax: 0.10.0
libtpu: 0.0.40
codegen_flags: <defaults>
</compile_context>

<pallas_src>
import functools

import jax
import jax.numpy as jnp
from jax.experimental import pallas as pl
from jax.experimental.pallas import tpu as pltpu


def _round_up(x: int, m: int) -> int:
    return ((x + m - 1) // m) * m


def _split_near_equal(total_aligned: int, target: int, align: int) -> int:
    """Tile size <= target (multiple of `align`) splitting `total_aligned`
    into near-equal blocks, minimizing padding beyond `total_aligned`."""
    if total_aligned <= target:
        return total_aligned
    nblocks = -(-total_aligned // target)                  # ceil
    return _round_up(-(-total_aligned // nblocks), align)  # near-equal, aligned


def _tpu_vmem_capacity_bytes() -> int:
    try:
        return int(pltpu.get_tpu_info().vmem_capacity_bytes)
    except Exception:
        return 64 * 1024 * 1024  # conservative (v7x-sized) fallback


def _linear_bias_kernel(x_ref, w_ref, b_ref, o_ref):
    # Single-K-block path: whole reduction in one MXU call, bias fused.
    o_ref[...] = (
        jnp.dot(x_ref[...], w_ref[...], preferred_element_type=jnp.float32)
        + b_ref[...]
    ).astype(o_ref.dtype)


def _linear_acc_kernel(x_ref, w_ref, b_ref, o_ref):
    # Multi-K-block path: accumulate directly into the resident output block
    # (its index_map ignores k). Bias is folded into the k==0 init, so there is
    # no separate epilogue pass. (Output dtype is f32 for this module.)
    k = pl.program_id(2)

    @pl.when(k == 0)
    def _():
        o_ref[...] = jnp.broadcast_to(b_ref[...], o_ref.shape).astype(o_ref.dtype)

    o_ref[...] += jnp.dot(
        x_ref[...], w_ref[...], preferred_element_type=jnp.float32
    ).astype(o_ref.dtype)


@functools.partial(
    jax.jit, static_argnames=("tm_target", "tn_target", "tk_target", "use_bf16")
)
def q_net_forward(x, w_t, b, *, tm_target=None, tn_target=None, tk_target=512,
                  use_bf16=False):
    """q = x @ w_t + b   (== torch.nn.Linear(hidden_dim, dout)(x))

    x   : (batch, hidden_dim) float32
    w_t : (hidden_dim, dout)  float32  (transpose of PyTorch's (dout, hidden_dim))
    b   : (dout,)             float32
    """
    batch, hidden_dim = x.shape
    dout = w_t.shape[1]
    out_dtype = x.dtype  # captured before any optional bf16 cast

    # ---- generation-aware defaults ----------------------------------------
    vmem_cap = _tpu_vmem_capacity_bytes()
    big_vmem = vmem_cap >= 100 * 1024 * 1024      # v5e/v6e: 128 MiB; v7x: 64 MiB
    if tm_target is None:
        tm_target = 1024 if big_vmem else 512
    if tn_target is None:
        tn_target = 1024 if big_vmem else 512

    m_align = 16 if use_bf16 else 8
    if use_bf16:
        # Opt-in: bf16 operands, f32 MXU accumulation (changes numerics slightly).
        x = x.astype(jnp.bfloat16)
        w_t = w_t.astype(jnp.bfloat16)

    # ---- tile / grid selection (near-equal splits -> minimal padding) ------
    b_al = _round_up(batch, m_align)
    n_al = _round_up(dout, 128)            # lane-dense output (unmasked stores)

    tm = _split_near_equal(b_al, tm_target, m_align)
    tn = _split_near_equal(n_al, tn_target, 128)

    if hidden_dim <= tk_target:
        # Full-K single block: full-dim blocks are exempt from the (8,128)
        # divisibility rule -> no K padding, no reduction loop.
        tk = hidden_dim
        k_pad = hidden_dim
    else:
        k_al = _round_up(hidden_dim, 128)
        tk = _split_near_equal(k_al, tk_target, 128)
        k_pad = _round_up(k_al, tk)

    m_pad = _round_up(b_al, tm)
    n_pad = _round_up(n_al, tn)
    grid_m = m_pad // tm
    grid_n = n_pad // tn
    grid_k = k_pad // tk

    # v7x has 2 TensorCores: make sure at least one "parallel" axis has >= 2
    # blocks when the batch allows it (negligible cost on single-TC parts).
    if grid_m * grid_n == 1 and b_al >= 2 * m_align:
        tm = _round_up(-(-b_al // 2), m_align)
        m_pad = _round_up(b_al, tm)
        grid_m = m_pad // tm

    # ---- padding only when actually needed (each pad/slice is an HBM copy) --
    if m_pad == batch and k_pad == hidden_dim:
        x_p = x
    else:
        x_p = jnp.pad(x, ((0, m_pad - batch), (0, k_pad - hidden_dim)))

    if k_pad == hidden_dim and n_pad == dout:
        w_p = w_t
    else:
        w_p = jnp.pad(w_t, ((0, k_pad - hidden_dim), (0, n_pad - dout)))

    b_p = b if n_pad == dout else jnp.pad(b, (0, n_pad - dout))
    b_p = b_p.reshape(1, n_pad)

    # ---- VMEM budget & cost estimate ---------------------------------------
    x_bytes = jnp.dtype(x_p.dtype).itemsize
    w_bytes = jnp.dtype(w_p.dtype).itemsize
    o_bytes = jnp.dtype(out_dtype).itemsize

    tile_bytes = (2 * tm * tk * x_bytes + 2 * tk * tn * w_bytes
                  + 2 * tn * 4 + 2 * tm * tn * o_bytes)
    vmem_ceiling = min(vmem_cap // 2, 64 * 1024 * 1024)
    vmem_limit = int(min(max(2 * tile_bytes, 16 * 1024 * 1024), vmem_ceiling))

    cost = pl.CostEstimate(
        flops=2 * m_pad * k_pad * n_pad,
        transcendentals=0,
        # Count re-streaming: x is read grid_n times, w grid_m times.
        bytes_accessed=(x_bytes * m_pad * k_pad * grid_n
                        + w_bytes * k_pad * n_pad * grid_m
                        + 4 * n_pad * grid_m * grid_n
                        + o_bytes * m_pad * n_pad),
    )

    kernel = _linear_bias_kernel if grid_k == 1 else _linear_acc_kernel

    out_padded = pl.pallas_call(
        kernel,
        out_shape=jax.ShapeDtypeStruct((m_pad, n_pad), out_dtype),
        grid_spec=pltpu.PrefetchScalarGridSpec(
            num_scalar_prefetch=0,
            grid=(grid_m, grid_n, grid_k),
            in_specs=[
                pl.BlockSpec((tm, tk), lambda i, j, k: (i, k)),   # x tile
                pl.BlockSpec((tk, tn), lambda i, j, k: (k, j)),   # w_t tile
                pl.BlockSpec((1, tn), lambda i, j, k: (0, j)),    # bias tile
            ],
            out_specs=pl.BlockSpec((tm, tn), lambda i, j, k: (i, j)),
        ),
        compiler_params=pltpu.CompilerParams(
            dimension_semantics=("parallel", "parallel", "arbitrary"),
            vmem_limit_bytes=vmem_limit,
        ),
        cost_estimate=cost,
    )(x_p, w_p, b_p)

    if m_pad == batch and n_pad == dout:
        return out_padded
    return out_padded[:batch, :dout]


if __name__ == "__main__":
    # Small shapes consistent with Q_Net(hidden_dim, dout).
    batch, hidden_dim, dout = 8, 32, 16

    key = jax.random.PRNGKey(0)
    kx, kw, kb = jax.random.split(key, 3)

    # Parameter init mimicking nn.Linear's uniform(-1/sqrt(fan_in), 1/sqrt(fan_in)).
    bound = 1.0 / (hidden_dim ** 0.5)
    w = jax.random.uniform(kw, (dout, hidden_dim), jnp.float32, -bound, bound)  # torch layout
    b = jax.random.uniform(kb, (dout,), jnp.float32, -bound, bound)
    x = jax.random.normal(kx, (batch, hidden_dim), jnp.float32)

    w_t = jnp.transpose(w)  # (hidden_dim, dout) for the kernel

    q = jax.block_until_ready(q_net_forward(x, w_t, b))
    q_ref = x @ w.T + b
    assert q.shape == (batch, dout)
    assert jnp.allclose(q, q_ref, atol=1e-5, rtol=1e-5)

    # Second check: unaligned, multi-tile shapes to exercise minimal padding,
    # near-equal M split, and the single-K fast path.
    b2, h2, d2 = 520, 200, 16
    k2x, k2w, k2b = jax.random.split(jax.random.PRNGKey(1), 3)
    bound2 = 1.0 / (h2 ** 0.5)
    w2 = jax.random.uniform(k2w, (d2, h2), jnp.float32, -bound2, bound2)
    bb2 = jax.random.uniform(k2b, (d2,), jnp.float32, -bound2, bound2)
    x2 = jax.random.normal(k2x, (b2, h2), jnp.float32)
    q2 = jax.block_until_ready(q_net_forward(x2, jnp.transpose(w2), bb2))
    q2_ref = x2 @ w2.T + bb2
    assert q2.shape == (b2, d2)
    assert jnp.allclose(q2, q2_ref, atol=1e-4, rtol=1e-4)

    # Third check: large K to exercise the multi-K accumulate-into-output path.
    b3, h3, d3 = 128, 1024, 64
    k3x, k3w, k3b = jax.random.split(jax.random.PRNGKey(2), 3)
    bound3 = 1.0 / (h3 ** 0.5)
    w3 = jax.random.uniform(k3w, (d3, h3), jnp.float32, -bound3, bound3)
    bb3 = jax.random.uniform(k3b, (d3,), jnp.float32, -bound3, bound3)
    x3 = jax.random.normal(k3x, (b3, h3), jnp.float32)
    q3 = jax.block_until_ready(
        q_net_forward(x3, jnp.transpose(w3), bb3, tk_target=256)
    )
    q3_ref = x3 @ w3.T + bb3
    assert q3.shape == (b3, d3)
    assert jnp.allclose(q3, q3_ref, atol=1e-4, rtol=1e-4)

    print("KERNEL_OK")
</pallas_src>

<mosaic_0001>
module attributes {stable_mosaic.version = 11 : i64} {
  func.func @_linear_bias_kernel(%arg0: i32, %arg1: i32, %arg2: i32, %arg3: memref<8x32xf32, #tpu.memory_space<vmem>>, %arg4: memref<32x128xf32, #tpu.memory_space<vmem>>, %arg5: memref<1x128xf32, #tpu.memory_space<vmem>>, %arg6: memref<8x128xf32, #tpu.memory_space<vmem>>) attributes {dimension_semantics = [#tpu.dimension_semantics<parallel>, #tpu.dimension_semantics<parallel>, #tpu.dimension_semantics<arbitrary>], iteration_bounds = array<i64: 1, 1, 1>, scalar_prefetch = 0 : i64, scratch_operands = 0 : i64, tpu.core_type = #tpu.core_type<tc>, window_params = [{transform_indices = @transform_0, window_bounds = array<i64: 8, 32>}, {transform_indices = @transform_1, window_bounds = array<i64: 32, 128>}, {transform_indices = @transform_2, window_bounds = array<i64: 1, 128>}, {transform_indices = @transform_3, window_bounds = array<i64: 8, 128>}]} {
    %c0 = arith.constant 0 : index
    %c0_0 = arith.constant 0 : index
    %0 = vector.load %arg3[%c0, %c0_0] : memref<8x32xf32, #tpu.memory_space<vmem>>, vector<8x32xf32>
    %c0_1 = arith.constant 0 : index
    %c0_2 = arith.constant 0 : index
    %1 = vector.load %arg4[%c0_1, %c0_2] : memref<32x128xf32, #tpu.memory_space<vmem>>, vector<32x128xf32>
    %cst = arith.constant dense<0.000000e+00> : vector<8x128xf32>
    %2 = tpu.matmul %0, %1, %cst {dimension_numbers = #tpu.dot_dimension_numbers<[1], [0], [0], [1], [0, 0, 1, 1], [], []>} : vector<8x32xf32>, vector<32x128xf32>, vector<8x128xf32> -> vector<8x128xf32>
    %c0_3 = arith.constant 0 : index
    %c0_4 = arith.constant 0 : index
    %3 = vector.load %arg5[%c0_3, %c0_4] : memref<1x128xf32, #tpu.memory_space<vmem>>, vector<1x128xf32>
    %4 = vector.broadcast %3 : vector<1x128xf32> to vector<8x128xf32>
    %5 = arith.addf %2, %4 : vector<8x128xf32>
    %c0_5 = arith.constant 0 : index
    %c0_6 = arith.constant 0 : index
    %6 = vector.load %arg6[%c0_5, %c0_6] : memref<8x128xf32, #tpu.memory_space<vmem>>, vector<8x128xf32>
    tpu.vector_store %arg6[%c0_5, %c0_6], %5 {strides = array<i32>} : memref<8x128xf32, #tpu.memory_space<vmem>>, vector<8x128xf32>,
    return
  }
  func.func @transform_0(%arg0: i32, %arg1: i32, %arg2: i32) -> (i32, i32) {
    %c0_i32 = arith.constant 0 : i32
    return %arg0, %arg2 : i32, i32
  }
  func.func @transform_1(%arg0: i32, %arg1: i32, %arg2: i32) -> (i32, i32) {
    %c0_i32 = arith.constant 0 : i32
    return %arg2, %arg1 : i32, i32
  }
  func.func @transform_2(%arg0: i32, %arg1: i32, %arg2: i32) -> (i32, i32) {
    %c0_i32 = arith.constant 0 : i32
    %c0_i32_0 = arith.constant 0 : i32
    return %c0_i32, %arg1 : i32, i32
  }
  func.func @transform_3(%arg0: i32, %arg1: i32, %arg2: i32) -> (i32, i32) {
    %c0_i32 = arith.constant 0 : i32
    return %arg0, %arg1 : i32, i32
  }
}

</mosaic_0001>

<llo_original>
// kernel: q_net_forward.1
$region0: #{q_net_forward.1}
  #allocation0 [shape = 'u32[]', space=smem, size = 0x4, offset = 0x4, fixed_abs, tag = 'smem constant byte address 0x4 - core index']
  #allocation1 [shape = 'u32[144,128]{1,0:T(1,128)}', space=vmem, size = 0x12000, scoped, tag = 'internal scratch']
  %s0 = inlined_call_operand.vmem [shape: f32[8,32], index: 0, kind: input, shape index: {}]
  %s1 = inlined_call_operand.vmem [shape: f32[32,128], index: 1, kind: input, shape index: {}]
  %s2 = inlined_call_operand.vmem [shape: f32[1,128], index: 2, kind: input, shape index: {}]
  %s3 = inlined_call_operand.hbm [shape: f32[8,128], index: 3, kind: output, shape index: {}]
  %s4 = sld [smem:[#allocation0]]
  $region22: #{q_net_forward.1} parent=0
    _
  %s6 = ssub.s32 1, %s4
  %s7 = scalar_select 0, %s6, %s4
  $region1: #{q_net_forward.1} parent=0
    #allocation2 [shape = 'u8[4096]{0}', space=vmem, size = 0x1000, scoped, tag = 'output window, operand 0, single buffered']
    #allocation3 [shape = 's32[1]{0}', space=sflag, size = 0x4, scoped, tag = 'scoped memory for q_net_forward.1']
    %8 = vsyncpa [#allocation3], 0
    // Predicated region
    $region2: #{q_net_forward.1} parent=1 // pred_check
      _
    $region3: #{q_net_forward.1} parent=1 // pred_check_branch
      %10 = sbr.rel (0) target = $region5
    $region4: #{q_net_forward.1} parent=1 // pred_region
      _
    $region5: #{q_net_forward.1} parent=1 // pred_fallthru
      _
    // Predicated region
    $region6: #{q_net_forward.1} parent=1 // pred_check
      _
    $region7: #{q_net_forward.1} parent=1 // pred_check_branch
      %12 = sbr.rel (0) target = $region9
    $region8: #{q_net_forward.1} parent=1 // pred_region
      _
    $region9: #{q_net_forward.1} parent=1 // pred_fallthru
      _
    // Predicated region
    $region10: #{q_net_forward.1} parent=1 // pred_check
      _
    $region11: #{q_net_forward.1} parent=1 // pred_check_branch
      %14 = sbr.rel (0) target = $region13
    $region12: #{q_net_forward.1} parent=1 // pred_region
      _
    $region13: #{q_net_forward.1} parent=1 // pred_fallthru
      _
    %v15 = vld [vmem:[%s0] sm:$0xff]
    %v16 = vld [vmem:[%s1] sm:$0xff]
    %v17 = vld [vmem:[%s1 + $0x8] sm:$0xff]
    %v18 = vld [vmem:[%s1 + $0x10] sm:$0xff]
    %v19 = vld [vmem:[%s1 + $0x18] sm:$0xff]
    %v20 = vld [vmem:[%s2] sm:$0x1]
    %v22 = vlaneseq
    %v23 = vshrl.u32 %v22, 7
    %v24 = vsub.s32 0, %v23
    %v25 = vrot.slane %v20, %v24
    %vm27 = vcmask 261120
    %v29 = vsel %vm27, %v15, 0
    %31 = vmatprep.subr.mxu0 0.0
    %32 = vmatpush1.msra.mxu0 %v16
    %33 = vmatprep.subr.mxu0 0.0
    %34 = vmatpush1.msra.mxu0 %v17
    %35 = vmatprep.subr.mxu0 0.0
    %36 = vmatpush1.msra.mxu0 %v18
    %37 = vmatprep.subr.mxu0 0.0
    %38 = vmatpush1.msra.mxu0 %v19
    %39 = vmatprep.subr.mxu0 0.0
    %40 = vmatpush1.msra.mxu0 0.0
    %41 = vmatprep.subr.mxu0 0.0
    %42 = vmatpush1.msra.mxu0 0.0
    %43 = vmatprep.subr.mxu0 0.0
    %44 = vmatpush1.msra.mxu0 0.0
    %45 = vmatprep.subr.mxu0 0.0
    %46 = vmatpush1.msra.mxu0 0.0
    %47 = vmatprep.subr.mxu0 0.0
    %48 = vmatpush1.msra.mxu0 0.0
    %49 = vmatprep.subr.mxu0 0.0
    %50 = vmatpush1.msra.mxu0 0.0
    %51 = vmatprep.subr.mxu0 0.0
    %52 = vmatpush1.msra.mxu0 0.0
    %53 = vmatprep.subr.mxu0 0.0
    %54 = vmatpush1.msra.mxu0 0.0
    %55 = vmatprep.subr.mxu0 0.0
    %56 = vmatpush1.msra.mxu0 0.0
    %57 = vmatprep.subr.mxu0 0.0
    %58 = vmatpush1.msra.mxu0 0.0
    %59 = vmatprep.subr.mxu0 0.0
    %60 = vmatpush1.msra.mxu0 0.0
    %61 = vmatprep.subr.mxu0 0.0
    %62 = vmatpush1.msra.mxu0 0.0
    %63 = vmatprep.subr.mxu0 0.0
    %64 = vmatpush1.msra.mxu0 0.0
    %65 = vmatprep.subr.mxu0 0.0
    %66 = vmatpush1.msra.mxu0 0.0
    %67 = vmatprep.subr.mxu0 0.0
    %68 = vmatpush1.msra.mxu0 0.0
    %69 = vmatprep.subr.mxu0 0.0
    %70 = vmatpush1.msra.mxu0 0.0
    %71 = vmatprep.subr.mxu0 0.0
    %72 = vmatpush1.msra.mxu0 0.0
    %73 = vmatprep.subr.mxu0 0.0
    %74 = vmatpush1.msra.mxu0 0.0
    %75 = vmatprep.subr.mxu0 0.0
    %76 = vmatpush1.msra.mxu0 0.0
    %77 = vmatprep.subr.mxu0 0.0
    %78 = vmatpush1.msra.mxu0 0.0
    %79 = vmatprep.subr.mxu0 0.0
    %80 = vmatpush1.msra.mxu0 0.0
    %81 = vmatprep.subr.mxu0 0.0
    %82 = vmatpush1.msra.mxu0 0.0
    %83 = vmatprep.subr.mxu0 0.0
    %84 = vmatpush1.msra.mxu0 0.0
    %85 = vmatprep.subr.mxu0 0.0
    %86 = vmatpush1.msra.mxu0 0.0
    %87 = vmatprep.subr.mxu0 0.0
    %88 = vmatpush1.msra.mxu0 0.0
    %89 = vmatprep.subr.mxu0 0.0
    %90 = vmatpush1.msra.mxu0 0.0
    %91 = vmatprep.subr.mxu0 0.0
    %92 = vmatpush1.msra.mxu0 0.0
    %93 = vmatprep.subr.mxu0 0.0
    %94 = vmatpush1.msra.mxu0 0.0
    %95 = vmatprep.mubr.f32.mxu0 0.0
    %96 = vmatmul.mubr.f32.gmra.mrb[0].mxu0 %v29
    %v97 = vpop.f32.mrb[0].mxu0
    %v98 = vadd.f32 %v25, %v97
    %v99 = vpop.f32.mrb[0].mxu0
    %100 = vdwg.mxu0
    %101 = vst [vmem:[#allocation2] sm:$0xff] %v98
    // Predicated region
    $region14: #{q_net_forward.1} parent=1 // pred_check
      _
    $region15: #{q_net_forward.1} parent=1 // pred_check_branch
      %103 = sbr.rel (0) target = $region17
    $region16: #{q_net_forward.1} parent=1 // pred_region
      %s105 = ssub.s32 128, 128
      %106 = vsyncadd [#allocation3], %s105
      %s108 = sshll.u32 [#allocation2], 4
      %s109 = int_to_ptr.vmem [resolvable:$true] %s108
      %111 = dma.vmem_to_hbm [thread:$0]  %s109, 128, %s3, [#allocation3]
    $region17: #{q_net_forward.1} parent=1 // pred_fallthru
      _
    // Predicated region
    $region18: #{q_net_forward.1} parent=1 // pred_check
      _
    $region19: #{q_net_forward.1} parent=1 // pred_check_branch
      %113 = sbr.rel (0) target = $region21
    $region20: #{q_net_forward.1} parent=1 // pred_region
      %114 = dma.done [#allocation3], 128
    $region21: #{q_net_forward.1} parent=1 // pred_fallthru
      _
    %115 = vsyncpa [#allocation3], 1

</llo_original>
